<compile_context>
chip_gen: v7x
topology: tpu7x:2x2x1
jax: 0.10.0
libtpu: 0.0.40
codegen_flags: <defaults>
</compile_context>

<pallas_src>
import jax
import jax.numpy as jnp
import numpy as np
from jax.experimental import pallas as pl
from jax.experimental.pallas import tpu as pltpu


def _round_up(a, m):
    return ((a + m - 1) // m) * m


def _mxu_input_dtype():
    """bf16 MXU/EUP inputs on v6e/v7x, f32 on v5e (no bf16 VPU/EUP) or unknown."""
    try:
        kind = jax.devices()[0].device_kind.lower()
    except Exception:
        return jnp.float32
    if any(tag in kind for tag in ("v6", "v7", "tpu7")):
        return jnp.bfloat16
    return jnp.float32


def _make_output_net_kernel(feedthrough, n_nodes, compute_dtype):
    """Residual net hot path: fused (skip | first-layer) matmul + 2 tanh layers."""

    def kernel(*refs):
        if feedthrough:
            (x_ref, u_ref, wx_ref, wu_ref, bf_ref,
             w2_ref, b2_ref, w3_ref, b3_ref, o_ref) = refs
        else:
            (x_ref, wx_ref, bf_ref,
             w2_ref, b2_ref, w3_ref, b3_ref, o_ref) = refs

        # Fused first layer: packed columns are [hidden(n_nodes) | skip(n_out)].
        # One MXU push per input stream, f32 accumulation.
        pre = jnp.dot(x_ref[...], wx_ref[...], preferred_element_type=jnp.float32)
        if feedthrough:
            pre = pre + jnp.dot(u_ref[...], wu_ref[...],
                                preferred_element_type=jnp.float32)
        pre = pre + bf_ref[...]                      # fused (b1 | bl) bias, f32

        lin = pre[:, n_nodes:]                       # skip branch (already includes bl)
        h = jnp.tanh(pre[:, :n_nodes].astype(compute_dtype))

        h = jnp.tanh((jnp.dot(h, w2_ref[...], preferred_element_type=jnp.float32)
                      + b2_ref[...]).astype(compute_dtype))
        nl = jnp.dot(h, w3_ref[...], preferred_element_type=jnp.float32) + b3_ref[...]

        o_ref[...] = (lin + nl).astype(o_ref.dtype)

    return kernel


def init_params(key, net_in, n_nodes, n_out):
    """Synthetic parameters matching the nn.Linear layers, pre-transposed (in, out)."""
    ks = jax.random.split(key, 8)
    scale = 0.1
    return {
        "wl": jax.random.normal(ks[0], (net_in, n_out), jnp.float32) * scale,
        "bl": jax.random.normal(ks[1], (1, n_out), jnp.float32) * scale,
        "w1": jax.random.normal(ks[2], (net_in, n_nodes), jnp.float32) * scale,
        "b1": jax.random.normal(ks[3], (1, n_nodes), jnp.float32) * scale,
        "w2": jax.random.normal(ks[4], (n_nodes, n_nodes), jnp.float32) * scale,
        "b2": jax.random.normal(ks[5], (1, n_nodes), jnp.float32) * scale,
        "w3": jax.random.normal(ks[6], (n_nodes, n_out), jnp.float32) * scale,
        "b3": jax.random.normal(ks[7], (1, n_out), jnp.float32) * scale,
    }


def pack_params(raw, nx, compute_dtype=jnp.float32):
    """Fuse (w1|wl)/(b1|bl) and split the packed first-layer weight rows by x/u stream."""
    w_f = jnp.concatenate([raw["w1"], raw["wl"]], axis=1)   # (net_in, n_nodes + n_out)
    b_f = jnp.concatenate([raw["b1"], raw["bl"]], axis=1)   # (1,      n_nodes + n_out)
    return {
        "wx": w_f[:nx].astype(compute_dtype),
        "wu": w_f[nx:].astype(compute_dtype),                # (0, .) if no feedthrough
        "b_f": b_f.astype(jnp.float32),
        "w2": raw["w2"].astype(compute_dtype),
        "b2": raw["b2"].astype(jnp.float32),
        "w3": raw["w3"].astype(compute_dtype),
        "b3": raw["b3"].astype(jnp.float32),
    }


def default_output_net_forward(x, u, packed, ny, *, block_b=1024):
    """x: (B, nx), u: (B, *nu) or None.  Returns (B, *ny) in float32."""
    B = x.shape[0]
    feedthrough = u is not None
    n_nodes = packed["w2"].shape[0]
    n_out = packed["w3"].shape[1]
    cdt = packed["w2"].dtype
    is_bf16 = np.dtype(cdt) == np.dtype(jnp.bfloat16)

    x_c = x.astype(cdt)
    u_c = u.reshape(B, -1).astype(cdt) if feedthrough else None

    # Batch tile: multiple of the sublane granularity, capped by block_b.
    sub = 16 if is_bf16 else 8
    TB = _round_up(min(int(block_b), max(B, 1)), sub)
    B_pad = _round_up(B, TB)
    if B_pad != B:
        x_c = jnp.pad(x_c, ((0, B_pad - B), (0, 0)))
        if feedthrough:
            u_c = jnp.pad(u_c, ((0, B_pad - B), (0, 0)))

    operands = [x_c]
    in_specs = [pl.BlockSpec((TB, x_c.shape[1]), lambda i: (i, 0))]
    if feedthrough:
        operands.append(u_c)
        in_specs.append(pl.BlockSpec((TB, u_c.shape[1]), lambda i: (i, 0)))
        weights = [packed["wx"], packed["wu"], packed["b_f"],
                   packed["w2"], packed["b2"], packed["w3"], packed["b3"]]
    else:
        weights = [packed["wx"], packed["b_f"],
                   packed["w2"], packed["b2"], packed["w3"], packed["b3"]]
    for w in weights:
        operands.append(w)
        # Constant block index -> VMEM-resident across all grid steps (no re-DMA).
        in_specs.append(pl.BlockSpec(w.shape, lambda i: (0, 0)))

    kernel = _make_output_net_kernel(feedthrough, n_nodes, cdt)

    out = pl.pallas_call(
        kernel,
        out_shape=jax.ShapeDtypeStruct((B_pad, n_out), jnp.float32),
        grid_spec=pltpu.PrefetchScalarGridSpec(
            num_scalar_prefetch=0,
            grid=(B_pad // TB,),
            in_specs=in_specs,
            out_specs=pl.BlockSpec((TB, n_out), lambda i: (i, 0)),
        ),
        compiler_params=pltpu.CompilerParams(
            dimension_semantics=("parallel",)),
    )(*operands)

    return out[:B].reshape((B,) + tuple(ny))


def reference_forward(x, u, raw, ny):
    B = x.shape[0]
    xu = jnp.concatenate([x, u.reshape(B, -1)], axis=1) if u is not None else x
    xu = xu.astype(jnp.float32)
    lin = xu @ raw["wl"] + raw["bl"]
    h = jnp.tanh(xu @ raw["w1"] + raw["b1"])
    h = jnp.tanh(h @ raw["w2"] + raw["b2"])
    nl = h @ raw["w3"] + raw["b3"]
    return (lin + nl).reshape((B,) + tuple(ny))


if __name__ == "__main__":
    # Small shapes consistent with the module: nx state dim, nu input dim (feedthrough), ny output dim.
    B, nx, nu, ny_dim = 8, 8, 3, 4
    n_nodes_per_layer = 64
    ny = (ny_dim,)
    net_in = nx + nu

    key = jax.random.PRNGKey(0)
    kx, ku, kp = jax.random.split(key, 3)
    x = jax.random.normal(kx, (B, nx), jnp.float32)
    u = jax.random.normal(ku, (B, nu), jnp.float32)

    raw = init_params(kp, net_in, n_nodes_per_layer, ny_dim)
    cdt = _mxu_input_dtype()                      # bf16 on v6e/v7x, f32 on v5e
    packed = pack_params(raw, nx, compute_dtype=cdt)

    out = default_output_net_forward(x, u, packed, ny)
    out = jax.block_until_ready(out)

    ref = reference_forward(x, u, raw, ny)
    assert out.shape == (B,) + ny, out.shape
    tol = 1e-5 if cdt == jnp.float32 else 5e-2    # bf16 MXU inputs -> looser tolerance
    assert bool(jnp.allclose(out, ref, atol=tol, rtol=tol)), \
        "Pallas kernel does not match reference"

    print("KERNEL_OK")
</pallas_src>

<mosaic_0001>
module attributes {stable_mosaic.version = 11 : i64} {
  func.func @kernel(%arg0: i32, %arg1: memref<8x8xf32, #tpu.memory_space<vmem>>, %arg2: memref<8x3xf32, #tpu.memory_space<vmem>>, %arg3: memref<8x68xf32, #tpu.memory_space<vmem>>, %arg4: memref<3x68xf32, #tpu.memory_space<vmem>>, %arg5: memref<1x68xf32, #tpu.memory_space<vmem>>, %arg6: memref<64x64xf32, #tpu.memory_space<vmem>>, %arg7: memref<1x64xf32, #tpu.memory_space<vmem>>, %arg8: memref<64x4xf32, #tpu.memory_space<vmem>>, %arg9: memref<1x4xf32, #tpu.memory_space<vmem>>, %arg10: memref<8x4xf32, #tpu.memory_space<vmem>>) attributes {dimension_semantics = [#tpu.dimension_semantics<parallel>], iteration_bounds = array<i64: 1>, scalar_prefetch = 0 : i64, scratch_operands = 0 : i64, tpu.core_type = #tpu.core_type<tc>, window_params = [{transform_indices = @transform_0, window_bounds = array<i64: 8, 8>}, {transform_indices = @transform_1, window_bounds = array<i64: 8, 3>}, {pipeline_mode = #tpu.pipeline_mode<synchronous>, transform_indices = @transform_2, window_bounds = array<i64: 8, 68>}, {pipeline_mode = #tpu.pipeline_mode<synchronous>, transform_indices = @transform_3, window_bounds = array<i64: 3, 68>}, {pipeline_mode = #tpu.pipeline_mode<synchronous>, transform_indices = @transform_4, window_bounds = array<i64: 1, 68>}, {pipeline_mode = #tpu.pipeline_mode<synchronous>, transform_indices = @transform_5, window_bounds = array<i64: 64, 64>}, {pipeline_mode = #tpu.pipeline_mode<synchronous>, transform_indices = @transform_6, window_bounds = array<i64: 1, 64>}, {pipeline_mode = #tpu.pipeline_mode<synchronous>, transform_indices = @transform_7, window_bounds = array<i64: 64, 4>}, {pipeline_mode = #tpu.pipeline_mode<synchronous>, transform_indices = @transform_8, window_bounds = array<i64: 1, 4>}, {transform_indices = @transform_9, window_bounds = array<i64: 8, 4>}]} {
    %c0 = arith.constant 0 : index
    %c0_0 = arith.constant 0 : index
    %0 = vector.load %arg1[%c0, %c0_0] : memref<8x8xf32, #tpu.memory_space<vmem>>, vector<8x8xf32>
    %c0_1 = arith.constant 0 : index
    %c0_2 = arith.constant 0 : index
    %1 = vector.load %arg3[%c0_1, %c0_2] : memref<8x68xf32, #tpu.memory_space<vmem>>, vector<8x68xf32>
    %cst = arith.constant dense<0.000000e+00> : vector<8x68xf32>
    %2 = tpu.matmul %0, %1, %cst {dimension_numbers = #tpu.dot_dimension_numbers<[1], [0], [0], [1], [0, 0, 1, 1], [], []>} : vector<8x8xf32>, vector<8x68xf32>, vector<8x68xf32> -> vector<8x68xf32>
    %c0_3 = arith.constant 0 : index
    %c0_4 = arith.constant 0 : index
    %3 = vector.load %arg2[%c0_3, %c0_4] : memref<8x3xf32, #tpu.memory_space<vmem>>, vector<8x3xf32>
    %c0_5 = arith.constant 0 : index
    %c0_6 = arith.constant 0 : index
    %4 = vector.load %arg4[%c0_5, %c0_6] : memref<3x68xf32, #tpu.memory_space<vmem>>, vector<3x68xf32>
    %cst_7 = arith.constant dense<0.000000e+00> : vector<8x68xf32>
    %5 = tpu.matmul %3, %4, %cst_7 {dimension_numbers = #tpu.dot_dimension_numbers<[1], [0], [0], [1], [0, 0, 1, 1], [], []>} : vector<8x3xf32>, vector<3x68xf32>, vector<8x68xf32> -> vector<8x68xf32>
    %6 = arith.addf %2, %5 : vector<8x68xf32>
    %c0_8 = arith.constant 0 : index
    %c0_9 = arith.constant 0 : index
    %7 = vector.load %arg5[%c0_8, %c0_9] : memref<1x68xf32, #tpu.memory_space<vmem>>, vector<1x68xf32>
    %8 = vector.broadcast %7 : vector<1x68xf32> to vector<8x68xf32>
    %9 = arith.addf %6, %8 : vector<8x68xf32>
    %10 = vector.extract_strided_slice %9 {offsets = [0, 64], sizes = [8, 4], strides = [1, 1]} : vector<8x68xf32> to vector<8x4xf32>
    %11 = vector.extract_strided_slice %9 {offsets = [0, 0], sizes = [8, 64], strides = [1, 1]} : vector<8x68xf32> to vector<8x64xf32>
    %12 = math.tanh %11 : vector<8x64xf32>
    %c0_10 = arith.constant 0 : index
    %c0_11 = arith.constant 0 : index
    %13 = vector.load %arg6[%c0_10, %c0_11] : memref<64x64xf32, #tpu.memory_space<vmem>>, vector<64x64xf32>
    %cst_12 = arith.constant dense<0.000000e+00> : vector<8x64xf32>
    %14 = tpu.matmul %12, %13, %cst_12 {dimension_numbers = #tpu.dot_dimension_numbers<[1], [0], [0], [1], [0, 0, 1, 1], [], []>} : vector<8x64xf32>, vector<64x64xf32>, vector<8x64xf32> -> vector<8x64xf32>
    %c0_13 = arith.constant 0 : index
    %c0_14 = arith.constant 0 : index
    %15 = vector.load %arg7[%c0_13, %c0_14] : memref<1x64xf32, #tpu.memory_space<vmem>>, vector<1x64xf32>
    %16 = vector.broadcast %15 : vector<1x64xf32> to vector<8x64xf32>
    %17 = arith.addf %14, %16 : vector<8x64xf32>
    %18 = math.tanh %17 : vector<8x64xf32>
    %c0_15 = arith.constant 0 : index
    %c0_16 = arith.constant 0 : index
    %19 = vector.load %arg8[%c0_15, %c0_16] : memref<64x4xf32, #tpu.memory_space<vmem>>, vector<64x4xf32>
    %cst_17 = arith.constant dense<0.000000e+00> : vector<8x4xf32>
    %20 = tpu.matmul %18, %19, %cst_17 {dimension_numbers = #tpu.dot_dimension_numbers<[1], [0], [0], [1], [0, 0, 1, 1], [], []>} : vector<8x64xf32>, vector<64x4xf32>, vector<8x4xf32> -> vector<8x4xf32>
    %c0_18 = arith.constant 0 : index
    %c0_19 = arith.constant 0 : index
    %21 = vector.load %arg9[%c0_18, %c0_19] : memref<1x4xf32, #tpu.memory_space<vmem>>, vector<1x4xf32>
    %22 = vector.broadcast %21 : vector<1x4xf32> to vector<8x4xf32>
    %23 = arith.addf %20, %22 : vector<8x4xf32>
    %24 = arith.addf %10, %23 : vector<8x4xf32>
    %c0_20 = arith.constant 0 : index
    %c0_21 = arith.constant 0 : index
    %25 = vector.load %arg10[%c0_20, %c0_21] : memref<8x4xf32, #tpu.memory_space<vmem>>, vector<8x4xf32>
    tpu.vector_store %arg10[%c0_20, %c0_21], %24 {strides = array<i32>} : memref<8x4xf32, #tpu.memory_space<vmem>>, vector<8x4xf32>,
    return
  }
  func.func @transform_0(%arg0: i32) -> (i32, i32) {
    %c0_i32 = arith.constant 0 : i32
    %c0_i32_0 = arith.constant 0 : i32
    return %arg0, %c0_i32 : i32, i32
  }
  func.func @transform_1(%arg0: i32) -> (i32, i32) {
    %c0_i32 = arith.constant 0 : i32
    %c0_i32_0 = arith.constant 0 : i32
    return %arg0, %c0_i32 : i32, i32
  }
  func.func @transform_2(%arg0: i32) -> (i32, i32) {
    %c0_i32 = arith.constant 0 : i32
    %c0_i32_0 = arith.constant 0 : i32
    %c0_i32_1 = arith.constant 0 : i32
    return %c0_i32, %c0_i32_0 : i32, i32
  }
  func.func @transform_3(%arg0: i32) -> (i32, i32) {
    %c0_i32 = arith.constant 0 : i32
    %c0_i32_0 = arith.constant 0 : i32
    %c0_i32_1 = arith.constant 0 : i32
    return %c0_i32, %c0_i32_0 : i32, i32
  }
  func.func @transform_4(%arg0: i32) -> (i32, i32) {
    %c0_i32 = arith.constant 0 : i32
    %c0_i32_0 = arith.constant 0 : i32
    %c0_i32_1 = arith.constant 0 : i32
    return %c0_i32, %c0_i32_0 : i32, i32
  }
  func.func @transform_5(%arg0: i32) -> (i32, i32) {
    %c0_i32 = arith.constant 0 : i32
    %c0_i32_0 = arith.constant 0 : i32
    %c0_i32_1 = arith.constant 0 : i32
    return %c0_i32, %c0_i32_0 : i32, i32
  }
  func.func @transform_6(%arg0: i32) -> (i32, i32) {
    %c0_i32 = arith.constant 0 : i32
    %c0_i32_0 = arith.constant 0 : i32
    %c0_i32_1 = arith.constant 0 : i32
    return %c0_i32, %c0_i32_0 : i32, i32
  }
  func.func @transform_7(%arg0: i32) -> (i32, i32) {
    %c0_i32 = arith.constant 0 : i32
    %c0_i32_0 = arith.constant 0 : i32
    %c0_i32_1 = arith.constant 0 : i32
    return %c0_i32, %c0_i32_0 : i32, i32
  }
  func.func @transform_8(%arg0: i32) -> (i32, i32) {
    %c0_i32 = arith.constant 0 : i32
    %c0_i32_0 = arith.constant 0 : i32
    %c0_i32_1 = arith.constant 0 : i32
    return %c0_i32, %c0_i32_0 : i32, i32
  }
  func.func @transform_9(%arg0: i32) -> (i32, i32) {
    %c0_i32 = arith.constant 0 : i32
    %c0_i32_0 = arith.constant 0 : i32
    return %arg0, %c0_i32 : i32, i32
  }
}

</mosaic_0001>

<llo_original>
// kernel: tpu_custom_call.1
$region0: #{tpu_custom_call.1}
  #allocation0 [shape = 'u32[]', space=smem, size = 0x4, offset = 0x4, fixed_abs, tag = 'smem constant byte address 0x4 - core index']
  #allocation1 [shape = 'u32[144,128]{1,0:T(1,128)}', space=vmem, size = 0x12000, scoped, tag = 'internal scratch']
  %s0 = inlined_call_operand.vmem [shape: f32[8,8], index: 0, kind: input, shape index: {}]
  %s1 = inlined_call_operand.vmem [shape: f32[8,3], index: 1, kind: input, shape index: {}]
  %s2 = inlined_call_operand.vmem [shape: f32[8,68], index: 2, kind: input, shape index: {}]
  %s3 = inlined_call_operand.vmem [shape: f32[3,68], index: 3, kind: input, shape index: {}]
  %s4 = inlined_call_operand.vmem [shape: f32[1,68], index: 4, kind: input, shape index: {}]
  %s5 = inlined_call_operand.vmem [shape: f32[64,64], index: 5, kind: input, shape index: {}]
  %s6 = inlined_call_operand.vmem [shape: f32[1,64], index: 6, kind: input, shape index: {}]
  %s7 = inlined_call_operand.vmem [shape: f32[64,4], index: 7, kind: input, shape index: {}]
  %s8 = inlined_call_operand.vmem [shape: f32[1,4], index: 8, kind: input, shape index: {}]
  %s9 = inlined_call_operand.vmem [shape: f32[8,4], index: 9, kind: output, shape index: {}]
  %s10 = sld [smem:[#allocation0]]
  $region46: #{tpu_custom_call.1} parent=0
    _
  %s12 = ssub.s32 1, %s10
  %s13 = scalar_select 0, %s12, %s10
  // Predicated region
  $region2: #{tpu_custom_call.1} parent=0 // pred_check
    _
  $region3: #{tpu_custom_call.1} parent=0 // pred_check_branch
    %15 = sbr.rel (0) target = $region5
  $region4: #{tpu_custom_call.1} parent=0 // pred_region
    _
  $region5: #{tpu_custom_call.1} parent=0 // pred_fallthru
    _
  // Predicated region
  $region6: #{tpu_custom_call.1} parent=0 // pred_check
    _
  $region7: #{tpu_custom_call.1} parent=0 // pred_check_branch
    %17 = sbr.rel (0) target = $region9
  $region8: #{tpu_custom_call.1} parent=0 // pred_region
    _
  $region9: #{tpu_custom_call.1} parent=0 // pred_fallthru
    _
  // Predicated region
  $region10: #{tpu_custom_call.1} parent=0 // pred_check
    _
  $region11: #{tpu_custom_call.1} parent=0 // pred_check_branch
    %19 = sbr.rel (0) target = $region13
  $region12: #{tpu_custom_call.1} parent=0 // pred_region
    _
  $region13: #{tpu_custom_call.1} parent=0 // pred_fallthru
    _
  // Predicated region
  $region14: #{tpu_custom_call.1} parent=0 // pred_check
    _
  $region15: #{tpu_custom_call.1} parent=0 // pred_check_branch
    %21 = sbr.rel (0) target = $region17
  $region16: #{tpu_custom_call.1} parent=0 // pred_region
    _
  $region17: #{tpu_custom_call.1} parent=0 // pred_fallthru
    _
  // Predicated region
  $region18: #{tpu_custom_call.1} parent=0 // pred_check
    _
  $region19: #{tpu_custom_call.1} parent=0 // pred_check_branch
    %23 = sbr.rel (0) target = $region21
  $region20: #{tpu_custom_call.1} parent=0 // pred_region
    _
  $region21: #{tpu_custom_call.1} parent=0 // pred_fallthru
    _
  // Predicated region
  $region22: #{tpu_custom_call.1} parent=0 // pred_check
    _
  $region23: #{tpu_custom_call.1} parent=0 // pred_check_branch
    %25 = sbr.rel (0) target = $region25
  $region24: #{tpu_custom_call.1} parent=0 // pred_region
    _
  $region25: #{tpu_custom_call.1} parent=0 // pred_fallthru
    _
  // Predicated region
  $region26: #{tpu_custom_call.1} parent=0 // pred_check
    _
  $region27: #{tpu_custom_call.1} parent=0 // pred_check_branch
    %27 = sbr.rel (0) target = $region29
  $region28: #{tpu_custom_call.1} parent=0 // pred_region
    _
  $region29: #{tpu_custom_call.1} parent=0 // pred_fallthru
    _
  // Predicated region
  $region30: #{tpu_custom_call.1} parent=0 // pred_check
    _
  $region31: #{tpu_custom_call.1} parent=0 // pred_check_branch
    %29 = sbr.rel (0) target = $region33
  $region32: #{tpu_custom_call.1} parent=0 // pred_region
    _
  $region33: #{tpu_custom_call.1} parent=0 // pred_fallthru
    _
  // Predicated region
  $region34: #{tpu_custom_call.1} parent=0 // pred_check
    _
  $region35: #{tpu_custom_call.1} parent=0 // pred_check_branch
    %31 = sbr.rel (0) target = $region37
  $region36: #{tpu_custom_call.1} parent=0 // pred_region
    _
  $region37: #{tpu_custom_call.1} parent=0 // pred_fallthru
    _
  %v32 = vld [vmem:[%s0] sm:$0xff]
  %v33 = vld [vmem:[%s2] sm:$0xff]
  %v34 = vld [vmem:[%s1] sm:$0xff]
  %v35 = vld [vmem:[%s3] sm:$0x7]
  %vm36 = vcmask 23552
  %v38 = vsel %vm36, %v34, 0
  %vm40 = vcmask 1042432
  %v42 = vsel %vm40, %v35, 0
  %44 = vmatprep.subr.mxu0 0.0
  %45 = vmatpush1.msra.mxu0 %v42
  %46 = vmatprep.subr.mxu0 0.0
  %47 = vmatpush1.msra.mxu0 0.0
  %48 = vmatprep.subr.mxu0 0.0
  %49 = vmatpush1.msra.mxu0 0.0
  %50 = vmatprep.subr.mxu0 0.0
  %51 = vmatpush1.msra.mxu0 0.0
  %52 = vmatprep.subr.mxu0 0.0
  %53 = vmatpush1.msra.mxu0 0.0
  %54 = vmatprep.subr.mxu0 0.0
  %55 = vmatpush1.msra.mxu0 0.0
  %56 = vmatprep.subr.mxu0 0.0
  %57 = vmatpush1.msra.mxu0 0.0
  %58 = vmatprep.subr.mxu0 0.0
  %59 = vmatpush1.msra.mxu0 0.0
  %60 = vmatprep.subr.mxu0 0.0
  %61 = vmatpush1.msra.mxu0 0.0
  %62 = vmatprep.subr.mxu0 0.0
  %63 = vmatpush1.msra.mxu0 0.0
  %64 = vmatprep.subr.mxu0 0.0
  %65 = vmatpush1.msra.mxu0 0.0
  %66 = vmatprep.subr.mxu0 0.0
  %67 = vmatpush1.msra.mxu0 0.0
  %68 = vmatprep.subr.mxu0 0.0
  %69 = vmatpush1.msra.mxu0 0.0
  %70 = vmatprep.subr.mxu0 0.0
  %71 = vmatpush1.msra.mxu0 0.0
  %72 = vmatprep.subr.mxu0 0.0
  %73 = vmatpush1.msra.mxu0 0.0
  %74 = vmatprep.subr.mxu0 0.0
  %75 = vmatpush1.msra.mxu0 0.0
  %76 = vmatprep.subr.mxu0 0.0
  %77 = vmatpush1.msra.mxu0 0.0
  %78 = vmatprep.subr.mxu0 0.0
  %79 = vmatpush1.msra.mxu0 0.0
  %80 = vmatprep.subr.mxu0 0.0
  %81 = vmatpush1.msra.mxu0 0.0
  %82 = vmatprep.subr.mxu0 0.0
  %83 = vmatpush1.msra.mxu0 0.0
  %84 = vmatprep.subr.mxu0 0.0
  %85 = vmatpush1.msra.mxu0 0.0
  %86 = vmatprep.subr.mxu0 0.0
  %87 = vmatpush1.msra.mxu0 0.0
  %88 = vmatprep.subr.mxu0 0.0
  %89 = vmatpush1.msra.mxu0 0.0
  %90 = vmatprep.subr.mxu0 0.0
  %91 = vmatpush1.msra.mxu0 0.0
  %92 = vmatprep.subr.mxu0 0.0
  %93 = vmatpush1.msra.mxu0 0.0
  %94 = vmatprep.subr.mxu0 0.0
  %95 = vmatpush1.msra.mxu0 0.0
  %96 = vmatprep.subr.mxu0 0.0
  %97 = vmatpush1.msra.mxu0 0.0
  %98 = vmatprep.subr.mxu0 0.0
  %99 = vmatpush1.msra.mxu0 0.0
  %100 = vmatprep.subr.mxu0 0.0
  %101 = vmatpush1.msra.mxu0 0.0
  %102 = vmatprep.subr.mxu0 0.0
  %103 = vmatpush1.msra.mxu0 0.0
  %104 = vmatprep.subr.mxu0 0.0
  %105 = vmatpush1.msra.mxu0 0.0
  %106 = vmatprep.subr.mxu0 0.0
  %107 = vmatpush1.msra.mxu0 0.0
  %108 = vmatprep.mubr.f32.mxu0 0.0
  %109 = vmatmul.mubr.f32.gmra.mrb[0].mxu0 %v38
  %v110 = vpop.f32.mrb[0].mxu0
  %v111 = vadd.f32 0.0, %v110
  %v112 = vpop.f32.mrb[0].mxu0
  %113 = vdwg.mxu0
  %vm114 = vcmask 64512
  %v116 = vsel %vm114, %v32, 0
  %118 = vmatprep.subr.mxu0 0.0
  %119 = vmatpush1.msra.mxu0 %v33
  %120 = vmatprep.subr.mxu0 0.0
  %121 = vmatpush1.msra.mxu0 0.0
  %122 = vmatprep.subr.mxu0 0.0
  %123 = vmatpush1.msra.mxu0 0.0
  %124 = vmatprep.subr.mxu0 0.0
  %125 = vmatpush1.msra.mxu0 0.0
  %126 = vmatprep.subr.mxu0 0.0
  %127 = vmatpush1.msra.mxu0 0.0
  %128 = vmatprep.subr.mxu0 0.0
  %129 = vmatpush1.msra.mxu0 0.0
  %130 = vmatprep.subr.mxu0 0.0
  %131 = vmatpush1.msra.mxu0 0.0
  %132 = vmatprep.subr.mxu0 0.0
  %133 = vmatpush1.msra.mxu0 0.0
  %134 = vmatprep.subr.mxu0 0.0
  %135 = vmatpush1.msra.mxu0 0.0
  %136 = vmatprep.subr.mxu0 0.0
  %137 = vmatpush1.msra.mxu0 0.0
  %138 = vmatprep.subr.mxu0 0.0
  %139 = vmatpush1.msra.mxu0 0.0
  %140 = vmatprep.subr.mxu0 0.0
  %141 = vmatpush1.msra.mxu0 0.0
  %142 = vmatprep.subr.mxu0 0.0
  %143 = vmatpush1.msra.mxu0 0.0
  %144 = vmatprep.subr.mxu0 0.0
  %145 = vmatpush1.msra.mxu0 0.0
  %146 = vmatprep.subr.mxu0 0.0
  %147 = vmatpush1.msra.mxu0 0.0
  %148 = vmatprep.subr.mxu0 0.0
  %149 = vmatpush1.msra.mxu0 0.0
  %150 = vmatprep.subr.mxu0 0.0
  %151 = vmatpush1.msra.mxu0 0.0
  %152 = vmatprep.subr.mxu0 0.0
  %153 = vmatpush1.msra.mxu0 0.0
  %154 = vmatprep.subr.mxu0 0.0
  %155 = vmatpush1.msra.mxu0 0.0
  %156 = vmatprep.subr.mxu0 0.0
  %157 = vmatpush1.msra.mxu0 0.0
  %158 = vmatprep.subr.mxu0 0.0
  %159 = vmatpush1.msra.mxu0 0.0
  %160 = vmatprep.subr.mxu0 0.0
  %161 = vmatpush1.msra.mxu0 0.0
  %162 = vmatprep.subr.mxu0 0.0
  %163 = vmatpush1.msra.mxu0 0.0
  %164 = vmatprep.subr.mxu0 0.0
  %165 = vmatpush1.msra.mxu0 0.0
  %166 = vmatprep.subr.mxu0 0.0
  %167 = vmatpush1.msra.mxu0 0.0
  %168 = vmatprep.subr.mxu0 0.0
  %169 = vmatpush1.msra.mxu0 0.0
  %170 = vmatprep.subr.mxu0 0.0
  %171 = vmatpush1.msra.mxu0 0.0
  %172 = vmatprep.subr.mxu0 0.0
  %173 = vmatpush1.msra.mxu0 0.0
  %174 = vmatprep.subr.mxu0 0.0
  %175 = vmatpush1.msra.mxu0 0.0
  %176 = vmatprep.subr.mxu0 0.0
  %177 = vmatpush1.msra.mxu0 0.0
  %178 = vmatprep.subr.mxu0 0.0
  %179 = vmatpush1.msra.mxu0 0.0
  %180 = vmatprep.subr.mxu0 0.0
  %181 = vmatpush1.msra.mxu0 0.0
  %182 = vmatprep.mubr.f32.mxu0 0.0
  %183 = vmatmul.mubr.f32.gmra.mrb[0].mxu0 %v116
  %v184 = vpop.f32.mrb[0].mxu0
  %v185 = vadd.f32 %v111, %v184
  %v186 = vpop.f32.mrb[0].mxu0
  %187 = vdwg.mxu0
  %v188 = vld [vmem:[%s4] sm:$0x1]
  %v190 = vlaneseq
  %v191 = vshrl.u32 %v190, 7
  %v192 = vsub.s32 0, %v191
  %v193 = vrot.slane %v188, %v192
  %v195 = vadd.f32 %v185, %v193
  %v196 = vtanh.pop %v195
  %v197 = vld [vmem:[%s5] sm:$0xff]
  %v198 = vld [vmem:[%s5 + $0x8] sm:$0xff]
  %v199 = vld [vmem:[%s5 + $0x10] sm:$0xff]
  %v200 = vld [vmem:[%s5 + $0x18] sm:$0xff]
  %v201 = vld [vmem:[%s5 + $0x20] sm:$0xff]
  %v202 = vld [vmem:[%s5 + $0x28] sm:$0xff]
  %v203 = vld [vmem:[%s5 + $0x30] sm:$0xff]
  %v204 = vld [vmem:[%s5 + $0x38] sm:$0xff]
  %v205 = vld [vmem:[%s6] sm:$0x1]
  %v207 = vlaneseq
  %v208 = vshrl.u32 %v207, 7
  %v209 = vsub.s32 0, %v208
  %v210 = vrot.slane %v205, %v209
  %vm212 = vcmask 523264
  %v214 = vsel %vm212, %v196, 0
  %216 = vmatprep.subr.mxu0 0.0
  %217 = vmatpush1.msra.mxu0 %v197
  %218 = vmatprep.subr.mxu0 0.0
  %219 = vmatpush1.msra.mxu0 %v198
  %220 = vmatprep.subr.mxu0 0.0
  %221 = vmatpush1.msra.mxu0 %v199
  %222 = vmatprep.subr.mxu0 0.0
  %223 = vmatpush1.msra.mxu0 %v200
  %224 = vmatprep.subr.mxu0 0.0
  %225 = vmatpush1.msra.mxu0 %v201
  %226 = vmatprep.subr.mxu0 0.0
  %227 = vmatpush1.msra.mxu0 %v202
  %228 = vmatprep.subr.mxu0 0.0
  %229 = vmatpush1.msra.mxu0 %v203
  %230 = vmatprep.subr.mxu0 0.0
  %231 = vmatpush1.msra.mxu0 %v204
  %232 = vmatprep.subr.mxu0 0.0
  %233 = vmatpush1.msra.mxu0 0.0
  %234 = vmatprep.subr.mxu0 0.0
  %235 = vmatpush1.msra.mxu0 0.0
  %236 = vmatprep.subr.mxu0 0.0
  %237 = vmatpush1.msra.mxu0 0.0
  %238 = vmatprep.subr.mxu0 0.0
  %239 = vmatpush1.msra.mxu0 0.0
  %240 = vmatprep.subr.mxu0 0.0
  %241 = vmatpush1.msra.mxu0 0.0
  %242 = vmatprep.subr.mxu0 0.0
  %243 = vmatpush1.msra.mxu0 0.0
  %244 = vmatprep.subr.mxu0 0.0
  %245 = vmatpush1.msra.mxu0 0.0
  %246 = vmatprep.subr.mxu0 0.0
  %247 = vmatpush1.msra.mxu0 0.0
  %248 = vmatprep.subr.mxu0 0.0
  %249 = vmatpush1.msra.mxu0 0.0
  %250 = vmatprep.subr.mxu0 0.0
  %251 = vmatpush1.msra.mxu0 0.0
  %252 = vmatprep.subr.mxu0 0.0
  %253 = vmatpush1.msra.mxu0 0.0
  %254 = vmatprep.subr.mxu0 0.0
  %255 = vmatpush1.msra.mxu0 0.0
  %256 = vmatprep.subr.mxu0 0.0
  %257 = vmatpush1.msra.mxu0 0.0
  %258 = vmatprep.subr.mxu0 0.0
  %259 = vmatpush1.msra.mxu0 0.0
  %260 = vmatprep.subr.mxu0 0.0
  %261 = vmatpush1.msra.mxu0 0.0
  %262 = vmatprep.subr.mxu0 0.0
  %263 = vmatpush1.msra.mxu0 0.0
  %264 = vmatprep.subr.mxu0 0.0
  %265 = vmatpush1.msra.mxu0 0.0
  %266 = vmatprep.subr.mxu0 0.0
  %267 = vmatpush1.msra.mxu0 0.0
  %268 = vmatprep.subr.mxu0 0.0
  %269 = vmatpush1.msra.mxu0 0.0
  %270 = vmatprep.subr.mxu0 0.0
  %271 = vmatpush1.msra.mxu0 0.0
  %272 = vmatprep.subr.mxu0 0.0
  %273 = vmatpush1.msra.mxu0 0.0
  %274 = vmatprep.subr.mxu0 0.0
  %275 = vmatpush1.msra.mxu0 0.0
  %276 = vmatprep.subr.mxu0 0.0
  %277 = vmatpush1.msra.mxu0 0.0
  %278 = vmatprep.subr.mxu0 0.0
  %279 = vmatpush1.msra.mxu0 0.0
  %280 = vmatprep.mubr.f32.mxu0 0.0
  %281 = vmatmul.mubr.f32.gmra.mrb[0].mxu0 %v214
  %v282 = vpop.f32.mrb[0].mxu0
  %v283 = vadd.f32 %v210, %v282
  %v284 = vpop.f32.mrb[0].mxu0
  %285 = vdwg.mxu0
  %v286 = vtanh.pop %v283
  %v287 = vld [vmem:[%s7] sm:$0xff]
  %v288 = vld [vmem:[%s7 + $0x8] sm:$0xff]
  %v289 = vld [vmem:[%s7 + $0x10] sm:$0xff]
  %v290 = vld [vmem:[%s7 + $0x18] sm:$0xff]
  %v291 = vld [vmem:[%s7 + $0x20] sm:$0xff]
  %v292 = vld [vmem:[%s7 + $0x28] sm:$0xff]
  %v293 = vld [vmem:[%s7 + $0x30] sm:$0xff]
  %v294 = vld [vmem:[%s7 + $0x38] sm:$0xff]
  %v295 = vld [vmem:[%s8] sm:$0x1]
  %v297 = vlaneseq
  %v298 = vshrl.u32 %v297, 7
  %v299 = vsub.s32 0, %v298
  %v300 = vrot.slane %v295, %v299
  %v303 = vsel %vm212, %v286, 0
  %305 = vmatprep.subr.mxu0 0.0
  %306 = vmatpush1.msra.mxu0 %v287
  %307 = vmatprep.subr.mxu0 0.0
  %308 = vmatpush1.msra.mxu0 %v288
  %309 = vmatprep.subr.mxu0 0.0
  %310 = vmatpush1.msra.mxu0 %v289
  %311 = vmatprep.subr.mxu0 0.0
  %312 = vmatpush1.msra.mxu0 %v290
  %313 = vmatprep.subr.mxu0 0.0
  %314 = vmatpush1.msra.mxu0 %v291
  %315 = vmatprep.subr.mxu0 0.0
  %316 = vmatpush1.msra.mxu0 %v292
  %317 = vmatprep.subr.mxu0 0.0
  %318 = vmatpush1.msra.mxu0 %v293
  %319 = vmatprep.subr.mxu0 0.0
  %320 = vmatpush1.msra.mxu0 %v294
  %321 = vmatprep.subr.mxu0 0.0
  %322 = vmatpush1.msra.mxu0 0.0
  %323 = vmatprep.subr.mxu0 0.0
  %324 = vmatpush1.msra.mxu0 0.0
  %325 = vmatprep.subr.mxu0 0.0
  %326 = vmatpush1.msra.mxu0 0.0
  %327 = vmatprep.subr.mxu0 0.0
  %328 = vmatpush1.msra.mxu0 0.0
  %329 = vmatprep.subr.mxu0 0.0
  %330 = vmatpush1.msra.mxu0 0.0
  %331 = vmatprep.subr.mxu0 0.0
  %332 = vmatpush1.msra.mxu0 0.0
  %333 = vmatprep.subr.mxu0 0.0
  %334 = vmatpush1.msra.mxu0 0.0
  %335 = vmatprep.subr.mxu0 0.0
  %336 = vmatpush1.msra.mxu0 0.0
  %337 = vmatprep.subr.mxu0 0.0
  %338 = vmatpush1.msra.mxu0 0.0
  %339 = vmatprep.subr.mxu0 0.0
  %340 = vmatpush1.msra.mxu0 0.0
  %341 = vmatprep.subr.mxu0 0.0
  %342 = vmatpush1.msra.mxu0 0.0
  %343 = vmatprep.subr.mxu0 0.0
  %344 = vmatpush1.msra.mxu0 0.0
  %345 = vmatprep.subr.mxu0 0.0
  %346 = vmatpush1.msra.mxu0 0.0
  %347 = vmatprep.subr.mxu0 0.0
  %348 = vmatpush1.msra.mxu0 0.0
  %349 = vmatprep.subr.mxu0 0.0
  %350 = vmatpush1.msra.mxu0 0.0
  %351 = vmatprep.subr.mxu0 0.0
  %352 = vmatpush1.msra.mxu0 0.0
  %353 = vmatprep.subr.mxu0 0.0
  %354 = vmatpush1.msra.mxu0 0.0
  %355 = vmatprep.subr.mxu0 0.0
  %356 = vmatpush1.msra.mxu0 0.0
  %357 = vmatprep.subr.mxu0 0.0
  %358 = vmatpush1.msra.mxu0 0.0
  %359 = vmatprep.subr.mxu0 0.0
  %360 = vmatpush1.msra.mxu0 0.0
  %361 = vmatprep.subr.mxu0 0.0
  %362 = vmatpush1.msra.mxu0 0.0
  %363 = vmatprep.subr.mxu0 0.0
  %364 = vmatpush1.msra.mxu0 0.0
  %365 = vmatprep.subr.mxu0 0.0
  %366 = vmatpush1.msra.mxu0 0.0
  %367 = vmatprep.subr.mxu0 0.0
  %368 = vmatpush1.msra.mxu0 0.0
  %369 = vmatprep.mubr.f32.mxu0 0.0
  %370 = vmatmul.mubr.f32.gmra.mrb[0].mxu0 %v303
  %v371 = vpop.f32.mrb[0].mxu0
  %v372 = vadd.f32 %v300, %v371
  %v373 = vpop.f32.mrb[0].mxu0
  %374 = vdwg.mxu0
  %376 = vrot.lane.b32.xlu0 %v372, 64
  %v377 = vpop.permute.xlu0 %376
  %v379 = vadd.f32 %v195, %v377
  %381 = vrot.lane.b32.xlu0 %v379, 64
  %v382 = vpop.permute.xlu0 %381
  %vm384 = vcmask 31744
  %385 = vst.msk [vmem:[%s9] sm:$0xff] %vm384, %v382
  // Predicated region
  $region38: #{tpu_custom_call.1} parent=0 // pred_check
    _
  $region39: #{tpu_custom_call.1} parent=0 // pred_check_branch
    %387 = sbr.rel (0) target = $region41
  $region40: #{tpu_custom_call.1} parent=0 // pred_region
    _
  $region41: #{tpu_custom_call.1} parent=0 // pred_fallthru
    _
  // Predicated region
  $region42: #{tpu_custom_call.1} parent=0 // pred_check
    _
  $region43: #{tpu_custom_call.1} parent=0 // pred_check_branch
    %389 = sbr.rel (0) target = $region45
  $region44: #{tpu_custom_call.1} parent=0 // pred_region
    _
  $region45: #{tpu_custom_call.1} parent=0 // pred_fallthru
    _

</llo_original>
